<compile_context>
chip_gen: v7x
topology: tpu7x:2x2x1
jax: 0.10.0
libtpu: 0.0.40
codegen_flags: <defaults>
</compile_context>

<pallas_src>
import functools

import jax
import jax.numpy as jnp
import numpy as np
from jax.experimental import pallas as pl
from jax.experimental.pallas import tpu as pltpu

LANE = 128
# Safe across generations: above v5e/v6e scoped defaults, below v7x physical.
VMEM_LIMIT_BYTES = 48 * 1024 * 1024


def _round_up(x, m):
    return (x + m - 1) // m * m


# ----------------------------- Pallas kernels -----------------------------

def _conv_matmul_kernel(x_ref, w_ref, b_ref, o_ref):
    # x: (TM, K) row tile of the im2col matrix (streamed / double-buffered),
    # w: (K, CO_pad) full weights (resident), b: (1, CO_pad) bias (resident).
    # o: (TM, CO_pad) = relu(x @ w + b); CO_pad % 128 == 0 -> lane-dense store.
    acc = jnp.dot(x_ref[...], w_ref[...], preferred_element_type=jnp.float32)
    o_ref[...] = jnp.maximum(acc + b_ref[...], 0.0)


def _tail_kernel(x_ref, w_ref, b_ref, p_ref, o_ref, *, num_classes):
    # Fused conv5 + ReLU + AvgPool2d((2,2),1) + view(-1,10) + log_softmax.
    # x: (M5, K5) im2col of conv4 activations, w: (K5, CO_pad), b: (1, CO_pad),
    # p: (N, M5) constant pooling matrix, o: (N, num_classes).
    act = jnp.maximum(
        jnp.dot(x_ref[...], w_ref[...], preferred_element_type=jnp.float32)
        + b_ref[...], 0.0)                                      # relu(conv5)
    pooled = jnp.dot(p_ref[...], act,
                     preferred_element_type=jnp.float32)        # GAP -> (N, CO_pad)
    logits = pooled[:, :num_classes]   # drop zero-padded class cols BEFORE softmax
    m = jnp.max(logits, axis=-1, keepdims=True)
    z = logits - m
    lse = jnp.log(jnp.sum(jnp.exp(z), axis=-1, keepdims=True))
    o_ref[...] = z - lse


# ------------------------------ wrappers -----------------------------------

def conv_matmul_bias_relu(x, w, b, *, tm=512):
    # x: (M, K) im2col matrix; w: (K, CO); b: (CO,).  Returns (M, CO).
    M, K = x.shape
    CO = w.shape[1]
    co_pad = _round_up(CO, LANE)

    # Lane-dense output: zero-pad CO (and bias) to a multiple of 128.
    w_p = jnp.pad(w, ((0, 0), (0, co_pad - CO)))
    b_p = jnp.pad(b.reshape(1, CO), ((0, 0), (0, co_pad - CO)))

    # Row-tile M; pad M up so every block is full (deterministic, no OOB reads).
    tm = min(tm, _round_up(M, 8))
    m_pad = _round_up(M, tm)
    x_p = jnp.pad(x, ((0, m_pad - M), (0, 0)))

    out = pl.pallas_call(
        _conv_matmul_kernel,
        out_shape=jax.ShapeDtypeStruct((m_pad, co_pad), jnp.float32),
        grid=(m_pad // tm,),
        in_specs=[
            pl.BlockSpec((tm, K), lambda i: (i, 0)),      # streamed row tiles
            pl.BlockSpec((K, co_pad), lambda i: (0, 0)),  # resident weights
            pl.BlockSpec((1, co_pad), lambda i: (0, 0)),  # resident bias
        ],
        out_specs=pl.BlockSpec((tm, co_pad), lambda i: (i, 0)),
        compiler_params=pltpu.CompilerParams(
            dimension_semantics=("parallel",),            # megacore on v7x
            vmem_limit_bytes=VMEM_LIMIT_BYTES),
    )(x_p, w_p, b_p)
    return out[:M, :CO]


def conv5_gap_logsoftmax(x_cols, w, b, n_batch):
    # Fused tail.  x_cols: (M5, K5) im2col for the 3x3/stride-2 conv5; conv5
    # output spatial is 2x2, so AvgPool2d((2,2),1)+view(-1,10) == mean over the
    # 4 spatial rows of each image (expressed as a tiny constant matmul).
    M5, K5 = x_cols.shape
    CO = w.shape[1]
    co_pad = _round_up(CO, LANE)
    w_p = jnp.pad(w, ((0, 0), (0, co_pad - CO)))
    b_p = jnp.pad(b.reshape(1, CO), ((0, 0), (0, co_pad - CO)))

    spatial = M5 // n_batch
    pool = np.zeros((n_batch, M5), dtype=np.float32)
    for n in range(n_batch):
        pool[n, n * spatial:(n + 1) * spatial] = 1.0 / spatial
    pool = jnp.asarray(pool)

    kern = functools.partial(_tail_kernel, num_classes=CO)
    return pl.pallas_call(
        kern,
        out_shape=jax.ShapeDtypeStruct((n_batch, CO), jnp.float32),
        grid=(1,),
        in_specs=[
            pl.BlockSpec((M5, K5), lambda i: (0, 0)),
            pl.BlockSpec((K5, co_pad), lambda i: (0, 0)),
            pl.BlockSpec((1, co_pad), lambda i: (0, 0)),
            pl.BlockSpec((n_batch, M5), lambda i: (0, 0)),
        ],
        out_specs=pl.BlockSpec((n_batch, CO), lambda i: (0, 0)),
        compiler_params=pltpu.CompilerParams(
            dimension_semantics=("arbitrary",),
            vmem_limit_bytes=VMEM_LIMIT_BYTES),
    )(x_cols, w_p, b_p, pool)


def im2col(x, kh, kw, stride):
    # x: (N, H, W, C) -> (N*OH*OW, KH*KW*C), patch order (kh, kw, ci)
    N, H, W, C = x.shape
    oh = (H - kh) // stride + 1
    ow = (W - kw) // stride + 1
    cols = []
    for i in range(kh):
        for j in range(kw):
            cols.append(x[:, i:i + stride * oh:stride,
                          j:j + stride * ow:stride, :])
    p = jnp.stack(cols, axis=3)  # (N, oh, ow, kh*kw, C)
    return p.reshape(N * oh * ow, kh * kw * C), oh, ow


def netconv_forward(x_nchw, params):
    # glue: NCHW -> NHWC, .float() as in the PyTorch module
    x = jnp.transpose(x_nchw, (0, 2, 3, 1)).astype(jnp.float32)
    N = x.shape[0]

    for (w_hwio, b, stride) in params[:-1]:            # conv1..conv4 (+ReLU)
        kh, kw, ci, co = w_hwio.shape
        cols, oh, ow = im2col(x, kh, kw, stride)
        out = conv_matmul_bias_relu(cols, w_hwio.reshape(kh * kw * ci, co), b)
        x = out.reshape(N, oh, ow, co)

    # Fused tail: conv5 + ReLU + AvgPool2d((2,2),1) + view(-1,10) + log_softmax
    w_hwio, b, stride = params[-1]
    kh, kw, ci, co = w_hwio.shape
    cols, oh, ow = im2col(x, kh, kw, stride)
    assert oh == 2 and ow == 2, "head expects a 2x2 conv5 output (49x49 input)"
    return conv5_gap_logsoftmax(cols, w_hwio.reshape(kh * kw * ci, co), b, N)


# ------------------------- deterministic parameters -------------------------

def init_params(key):
    # (in_channels, out_channels, stride) for conv1..conv5, all 3x3 kernels
    cfg = [(3, 16, 1), (16, 32, 2), (32, 64, 2), (64, 128, 2), (128, 10, 2)]
    params = []
    for idx, (ci, co, stride) in enumerate(cfg):
        kw_key, kb_key = jax.random.split(jax.random.fold_in(key, idx))
        bound = 1.0 / np.sqrt(ci * 9)
        w = jax.random.uniform(kw_key, (3, 3, ci, co), jnp.float32, -bound, bound)
        b = jax.random.uniform(kb_key, (co,), jnp.float32, -bound, bound)
        params.append((w, b, stride))
    return params


# ------------------------------ pure-JAX reference ---------------------------

def ref_forward(x_nchw, params):
    x = jnp.transpose(x_nchw, (0, 2, 3, 1)).astype(jnp.float32)
    for (w, b, stride) in params:
        x = jax.lax.conv_general_dilated(
            x, w, (stride, stride), "VALID",
            dimension_numbers=("NHWC", "HWIO", "NHWC"))
        x = jnp.maximum(x + b, 0.0)
    pooled = jnp.mean(x, axis=(1, 2))   # 2x2 spatial, pool covers it entirely
    return jax.nn.log_softmax(pooled, axis=-1)


if __name__ == "__main__":
    key = jax.random.PRNGKey(0)
    # 49x49 input -> conv stack spatial sizes 47 -> 23 -> 11 -> 5 -> 2 -> GAP -> 1
    x = jax.random.normal(jax.random.fold_in(key, 100), (2, 3, 49, 49), jnp.float32)
    params = init_params(key)

    out = netconv_forward(x, params)
    out = jax.block_until_ready(out)

    ref = ref_forward(x, params)
    np.testing.assert_allclose(np.asarray(out), np.asarray(ref),
                               rtol=1e-4, atol=1e-4)
    print("KERNEL_OK")
</pallas_src>

<mosaic_0001>
module attributes {stable_mosaic.version = 11 : i64} {
  func.func @_conv_matmul_kernel(%arg0: i32, %arg1: memref<512x27xf32, #tpu.memory_space<vmem>>, %arg2: memref<27x128xf32, #tpu.memory_space<vmem>>, %arg3: memref<1x128xf32, #tpu.memory_space<vmem>>, %arg4: memref<512x128xf32, #tpu.memory_space<vmem>>) attributes {dimension_semantics = [#tpu.dimension_semantics<parallel>], iteration_bounds = array<i64: 9>, scalar_prefetch = 0 : i64, scratch_operands = 0 : i64, tpu.core_type = #tpu.core_type<tc>, window_params = [{transform_indices = @transform_0, window_bounds = array<i64: 512, 27>}, {pipeline_mode = #tpu.pipeline_mode<synchronous>, transform_indices = @transform_1, window_bounds = array<i64: 27, 128>}, {pipeline_mode = #tpu.pipeline_mode<synchronous>, transform_indices = @transform_2, window_bounds = array<i64: 1, 128>}, {transform_indices = @transform_3, window_bounds = array<i64: 512, 128>}]} {
    %c0 = arith.constant 0 : index
    %c0_0 = arith.constant 0 : index
    %0 = vector.load %arg1[%c0, %c0_0] : memref<512x27xf32, #tpu.memory_space<vmem>>, vector<512x27xf32>
    %c0_1 = arith.constant 0 : index
    %c0_2 = arith.constant 0 : index
    %1 = vector.load %arg2[%c0_1, %c0_2] : memref<27x128xf32, #tpu.memory_space<vmem>>, vector<27x128xf32>
    %cst = arith.constant dense<0.000000e+00> : vector<512x128xf32>
    %2 = tpu.matmul %0, %1, %cst {dimension_numbers = #tpu.dot_dimension_numbers<[1], [0], [0], [1], [0, 0, 1, 1], [], []>} : vector<512x27xf32>, vector<27x128xf32>, vector<512x128xf32> -> vector<512x128xf32>
    %c0_3 = arith.constant 0 : index
    %c0_4 = arith.constant 0 : index
    %3 = vector.load %arg3[%c0_3, %c0_4] : memref<1x128xf32, #tpu.memory_space<vmem>>, vector<1x128xf32>
    %4 = vector.broadcast %3 : vector<1x128xf32> to vector<512x128xf32>
    %5 = arith.addf %2, %4 : vector<512x128xf32>
    %cst_5 = arith.constant 0.000000e+00 : f32
    %6 = vector.broadcast %cst_5 : f32 to vector<512x128xf32>
    %7 = arith.maximumf %5, %6 : vector<512x128xf32>
    %c0_6 = arith.constant 0 : index
    %c0_7 = arith.constant 0 : index
    %8 = vector.load %arg4[%c0_6, %c0_7] : memref<512x128xf32, #tpu.memory_space<vmem>>, vector<512x128xf32>
    tpu.vector_store %arg4[%c0_6, %c0_7], %7 {strides = array<i32>} : memref<512x128xf32, #tpu.memory_space<vmem>>, vector<512x128xf32>,
    return
  }
  func.func @transform_0(%arg0: i32) -> (i32, i32) {
    %c0_i32 = arith.constant 0 : i32
    %c0_i32_0 = arith.constant 0 : i32
    return %arg0, %c0_i32 : i32, i32
  }
  func.func @transform_1(%arg0: i32) -> (i32, i32) {
    %c0_i32 = arith.constant 0 : i32
    %c0_i32_0 = arith.constant 0 : i32
    %c0_i32_1 = arith.constant 0 : i32
    return %c0_i32, %c0_i32_0 : i32, i32
  }
  func.func @transform_2(%arg0: i32) -> (i32, i32) {
    %c0_i32 = arith.constant 0 : i32
    %c0_i32_0 = arith.constant 0 : i32
    %c0_i32_1 = arith.constant 0 : i32
    return %c0_i32, %c0_i32_0 : i32, i32
  }
  func.func @transform_3(%arg0: i32) -> (i32, i32) {
    %c0_i32 = arith.constant 0 : i32
    %c0_i32_0 = arith.constant 0 : i32
    return %arg0, %c0_i32 : i32, i32
  }
}

</mosaic_0001>

<llo_original>
// kernel: tpu_custom_call.1
$region0: #{tpu_custom_call.1}
  #allocation0 [shape = 'u32[]', space=smem, size = 0x4, offset = 0x4, fixed_abs, tag = 'smem constant byte address 0x4 - core index']
  #allocation1 [shape = 'u32[144,128]{1,0:T(1,128)}', space=vmem, size = 0x12000, scoped, tag = 'internal scratch']
  %s0 = inlined_call_operand.vmem [shape: f32[4608,27], index: 0, kind: input, shape index: {}]
  %s1 = inlined_call_operand.vmem [shape: f32[27,128], index: 1, kind: input, shape index: {}]
  %s2 = inlined_call_operand.vmem [shape: f32[1,128], index: 2, kind: input, shape index: {}]
  %s3 = inlined_call_operand.hbm [shape: f32[4608,128], index: 3, kind: output, shape index: {}]
  %s4 = sld [smem:[#allocation0]]
  $region45: #{tpu_custom_call.1} parent=0
    _
  %s6 = ssub.s32 1, %s4
  %s7 = scalar_select 0, %s6, %s4
  $region1: #{tpu_custom_call.1} parent=0
    #allocation2 [shape = 'u8[524288]{0}', space=vmem, size = 0x80000, scoped, tag = 'output window, operand 0']
    #allocation3 [shape = 's32[2]{0}', space=sflag, size = 0x8, scoped, tag = 'scoped memory for tpu_custom_call.1']
    %8 = vsyncpa [#allocation3], 0
    %s9 = scalar_lea.sflag [#allocation3], 1
    %10 = vsyncpa %s9, 0
    loop: start=0, step=1, limit=11
    $region2: #{tpu_custom_call.1} parent=1 // loop_pre_header
      _
    $region3: #{tpu_custom_call.1} parent=1 // loop_header
      %s12 = sphi 0, %s16
      %p13 = scmp.ge.s32.totalorder %s12, 11
      %s22 = sphi 0, %s24
      %s25 = sphi 0, %s22
      %s26 = sphi 0, %s25
      %s42 = sphi 0, %s26
      %s46 = sphi 0, %s46
      %s48 = sphi 0, %s46
      %s49 = sphi 0, %s48
      %s63 = sphi 0, %s49
      %s67 = sphi 0, %s67
      %s69 = sphi 0, %s67
      %s70 = sphi 0, %s69
      %s84 = sphi 0, %s70
      %s90 = sphi 0, %s92
      %s93 = sphi 0, %s90
      %s94 = sphi 0, %s93
      %s110 = sphi 0, %s94
    $region4: #{tpu_custom_call.1} parent=1 // loop_header_branch
      %15 = sbr.rel (%p13) target = $region8
    $region5: #{tpu_custom_call.1} parent=1 // loop_body
      %s17 = ssub.s32 %s12, 1
      %s18 = ssub.s32 %s12, 2
      %s19 = sadd.s32 %s12, 1
      %s20 = ssub.s32 %s12, %s19
      %p21 = scmp.eq.s32.totalorder %s20, 0
      %s23 = sadd.s32 %s22, 1
      %s24 = scalar_select %p21, %s22, %s23
      %p27 = pneg %p21
      %p28 = scmp.eq.s32.totalorder %s12, 8
      %p29 = por %p27, %p28
      %p30 = scmp.ne.s32.totalorder %s22, %s25
      %p31 = scmp.eq.s32.totalorder %s12, 0
      %p32 = por %p30, %p31
      %p33 = scmp.ne.s32.totalorder %s22, %s25
      %p34 = scmp.eq.s32.totalorder %s17, 8
      %p35 = por %p33, %p34
      %p36 = scmp.ne.s32.totalorder %s25, %s26
      %p37 = scmp.eq.s32.totalorder %s17, 0
      %p38 = por %p36, %p37
      %p39 = scmp.ne.s32.totalorder %s25, %s26
      %p40 = scmp.eq.s32.totalorder %s18, 8
      %p41 = por %p39, %p40
      %p43 = scmp.ne.s32.totalorder %s26, %s42
      %p44 = scmp.eq.s32.totalorder %s18, 0
      %p45 = por %p43, %p44
      %s47 = sadd.s32 %s46, 1
      %p50 = scmp.eq.s32.totalorder %s12, 8
      %p51 = scmp.ne.s32.totalorder %s46, %s48
      %p52 = scmp.eq.s32.totalorder %s12, 0
      %p53 = por %p51, %p52
      %p54 = scmp.ne.s32.totalorder %s46, %s48
      %p55 = scmp.eq.s32.totalorder %s17, 8
      %p56 = por %p54, %p55
      %p57 = scmp.ne.s32.totalorder %s48, %s49
      %p58 = scmp.eq.s32.totalorder %s17, 0
      %p59 = por %p57, %p58
      %p60 = scmp.ne.s32.totalorder %s48, %s49
      %p61 = scmp.eq.s32.totalorder %s18, 8
      %p62 = por %p60, %p61
      %p64 = scmp.ne.s32.totalorder %s49, %s63
      %p65 = scmp.eq.s32.totalorder %s18, 0
      %p66 = por %p64, %p65
      %s68 = sadd.s32 %s67, 1
      %p71 = scmp.eq.s32.totalorder %s12, 8
      %p72 = scmp.ne.s32.totalorder %s67, %s69
      %p73 = scmp.eq.s32.totalorder %s12, 0
      %p74 = por %p72, %p73
      %p75 = scmp.ne.s32.totalorder %s67, %s69
      %p76 = scmp.eq.s32.totalorder %s17, 8
      %p77 = por %p75, %p76
      %p78 = scmp.ne.s32.totalorder %s69, %s70
      %p79 = scmp.eq.s32.totalorder %s17, 0
      %p80 = por %p78, %p79
      %p81 = scmp.ne.s32.totalorder %s69, %s70
      %p82 = scmp.eq.s32.totalorder %s18, 8
      %p83 = por %p81, %p82
      %p85 = scmp.ne.s32.totalorder %s70, %s84
      %p86 = scmp.eq.s32.totalorder %s18, 0
      %p87 = por %p85, %p86
      %s88 = ssub.s32 %s12, %s19
      %p89 = scmp.eq.s32.totalorder %s88, 0
      %s91 = sadd.s32 %s90, 1
      %s92 = scalar_select %p89, %s90, %s91
      %p95 = pneg %p89
      %p96 = scmp.eq.s32.totalorder %s12, 8
      %p97 = por %p95, %p96
      %p98 = scmp.ne.s32.totalorder %s90, %s93
      %p99 = scmp.eq.s32.totalorder %s12, 0
      %p100 = por %p98, %p99
      %p101 = scmp.ne.s32.totalorder %s90, %s93
      %p102 = scmp.eq.s32.totalorder %s17, 8
      %p103 = por %p101, %p102
      %p104 = scmp.ne.s32.totalorder %s93, %s94
      %p105 = scmp.eq.s32.totalorder %s17, 0
      %p106 = por %p104, %p105
      %p107 = scmp.ne.s32.totalorder %s93, %s94
      %p108 = scmp.eq.s32.totalorder %s18, 8
      %p109 = por %p107, %p108
      %p111 = scmp.ne.s32.totalorder %s94, %s110
      %p112 = scmp.eq.s32.totalorder %s18, 0
      %p113 = por %p111, %p112
      %p114 = scmp.le.s32.totalorder 1, %s12
      %p115 = scmp.lt.s32.totalorder %s12, 10
      %p116 = pnand %p114, %p115
      %p117 = pneg %p116
      // Predicated region
      $region9: #{tpu_custom_call.1} parent=5 // pred_check
        _
      $region10: #{tpu_custom_call.1} parent=5 // pred_check_branch
        %119 = sbr.rel (%p116) target = $region12
      $region11: #{tpu_custom_call.1} parent=5 // pred_region
        %s120 = ssub.s32 %s12, 1
        // Predicated region
        $region13: #{tpu_custom_call.1} parent=11 // pred_check
          %p121 = pneg %p59
        $region14: #{tpu_custom_call.1} parent=11 // pred_check_branch
          %123 = sbr.rel (%p121) target = $region16
        $region15: #{tpu_custom_call.1} parent=11 // pred_region
          _
        $region16: #{tpu_custom_call.1} parent=11 // pred_fallthru
          _
        // Predicated region
        $region17: #{tpu_custom_call.1} parent=11 // pred_check
          %p124 = pneg %p80
        $region18: #{tpu_custom_call.1} parent=11 // pred_check_branch
          %126 = sbr.rel (%p124) target = $region20
        $region19: #{tpu_custom_call.1} parent=11 // pred_region
          _
        $region20: #{tpu_custom_call.1} parent=11 // pred_fallthru
          _
      $region12: #{tpu_custom_call.1} parent=5 // pred_fallthru
        _
      %p127 = scmp.lt.s32.totalorder %s12, 9
      // Predicated region
      $region21: #{tpu_custom_call.1} parent=5 // pred_check
        %p128 = pneg %p127
      $region22: #{tpu_custom_call.1} parent=5 // pred_check_branch
        %130 = sbr.rel (%p128) target = $region24
      $region23: #{tpu_custom_call.1} parent=5 // pred_region
        // Predicated region
        $region25: #{tpu_custom_call.1} parent=23 // pred_check
          %p131 = pneg %p32
        $region26: #{tpu_custom_call.1} parent=23 // pred_check_branch
          %133 = sbr.rel (%p131) target = $region28
        $region27: #{tpu_custom_call.1} parent=23 // pred_region
          %s134 = smul.u32 64, %s12
          %p135 = scmp.lt.s32.totalorder %s134, 575
          %s136 = scalar_select %p135, %s134, 575
          %s137 = smul.addr %s136, 8
          %s138 = scalar_lea.vmem %s0, %s137
          %s139 = smul.u32 64, %s12
        $region28: #{tpu_custom_call.1} parent=23 // pred_fallthru
          _
      $region24: #{tpu_custom_call.1} parent=5 // pred_fallthru
        _
      %p140 = scmp.le.s32.totalorder 1, %s12
      %p141 = scmp.lt.s32.totalorder %s12, 10
      %p142 = pnand %p140, %p141
      %p143 = pneg %p142
      // Predicated region
      $region29: #{tpu_custom_call.1} parent=5 // pred_check
        _
      $region30: #{tpu_custom_call.1} parent=5 // pred_check_branch
        %145 = sbr.rel (%p142) target = $region32
      $region31: #{tpu_custom_call.1} parent=5 // pred_region
        %s146 = ssub.s32 %s12, 1
        %s147 = smul.u32 64, %s17
        %p148 = scmp.lt.s32.totalorder %s147, 575
        %s149 = scalar_select %p148, %s147, 575
        %s150 = smul.addr %s149, 8
        %s151 = scalar_lea.vmem %s0, %s150
        %p152 = pneg %p38
        %p153 = pneg %p35
        %p154 = pneg %p59
        %p155 = pneg %p56
        %p156 = pneg %p80
        %p157 = pneg %p77
        %p158 = pneg %p106
        %p159 = pneg %p103
        %s160 = sand.u32 %s93, 1
        %s161 = scalar_lea.sflag [#allocation3], %s160
        %s162 = sand.u32 %s93, 1
        %s163 = smul.addr %s162, 512
        %s164 = scalar_lea.vmem [#allocation2], %s163
        %s165 = smul.u32 64, %s17
        %p166 = scmp.lt.s32.totalorder %s165, 575
        %s167 = scalar_select %p166, %s165, 575
        %s168 = smul.addr %s167, 8
        %s169 = scalar_lea.vmem %s0, %s168
        %s170 = smul.u32 64, %s17
        %s171 = smul.u32 64, %s17
        %v172 = vld [vmem:[%s169] sm:$0xff]
        %v173 = vld [vmem:[%s169 + $0x8] sm:$0xff]
        %v174 = vld [vmem:[%s169 + $0x10] sm:$0xff]
        %v175 = vld [vmem:[%s169 + $0x18] sm:$0xff]
        %v176 = vld [vmem:[%s169 + $0x20] sm:$0xff]
        %v177 = vld [vmem:[%s169 + $0x28] sm:$0xff]
        %v178 = vld [vmem:[%s169 + $0x30] sm:$0xff]
        %v179 = vld [vmem:[%s169 + $0x38] sm:$0xff]
        %v180 = vld [vmem:[%s169 + $0x40] sm:$0xff]
        %v181 = vld [vmem:[%s169 + $0x48] sm:$0xff]
        %v182 = vld [vmem:[%s169 + $0x50] sm:$0xff]
        %v183 = vld [vmem:[%s169 + $0x58] sm:$0xff]
        %v184 = vld [vmem:[%s169 + $0x60] sm:$0xff]
        %v185 = vld [vmem:[%s169 + $0x68] sm:$0xff]
        %v186 = vld [vmem:[%s169 + $0x70] sm:$0xff]
        %v187 = vld [vmem:[%s169 + $0x78] sm:$0xff]
        %v188 = vld [vmem:[%s169 + $0x80] sm:$0xff]
        %v189 = vld [vmem:[%s169 + $0x88] sm:$0xff]
        %v190 = vld [vmem:[%s169 + $0x90] sm:$0xff]
        %v191 = vld [vmem:[%s169 + $0x98] sm:$0xff]
        %v192 = vld [vmem:[%s169 + $0xa0] sm:$0xff]
        %v193 = vld [vmem:[%s169 + $0xa8] sm:$0xff]
        %v194 = vld [vmem:[%s169 + $0xb0] sm:$0xff]
        %v195 = vld [vmem:[%s169 + $0xb8] sm:$0xff]
        %v196 = vld [vmem:[%s169 + $0xc0] sm:$0xff]
        %v197 = vld [vmem:[%s169 + $0xc8] sm:$0xff]
        %v198 = vld [vmem:[%s169 + $0xd0] sm:$0xff]
        %v199 = vld [vmem:[%s169 + $0xd8] sm:$0xff]
        %v200 = vld [vmem:[%s169 + $0xe0] sm:$0xff]
        %v201 = vld [vmem:[%s169 + $0xe8] sm:$0xff]
        %v202 = vld [vmem:[%s169 + $0xf0] sm:$0xff]
        %v203 = vld [vmem:[%s169 + $0xf8] sm:$0xff]
        %v204 = vld [vmem:[%s169 + $0x100] sm:$0xff]
        %v205 = vld [vmem:[%s169 + $0x108] sm:$0xff]
        %v206 = vld [vmem:[%s169 + $0x110] sm:$0xff]
        %v207 = vld [vmem:[%s169 + $0x118] sm:$0xff]
        %v208 = vld [vmem:[%s169 + $0x120] sm:$0xff]
        %v209 = vld [vmem:[%s169 + $0x128] sm:$0xff]
        %v210 = vld [vmem:[%s169 + $0x130] sm:$0xff]
        %v211 = vld [vmem:[%s169 + $0x138] sm:$0xff]
        %v212 = vld [vmem:[%s169 + $0x140] sm:$0xff]
        %v213 = vld [vmem:[%s169 + $0x148] sm:$0xff]
        %v214 = vld [vmem:[%s169 + $0x150] sm:$0xff]
        %v215 = vld [vmem:[%s169 + $0x158] sm:$0xff]
        %v216 = vld [vmem:[%s169 + $0x160] sm:$0xff]
        %v217 = vld [vmem:[%s169 + $0x168] sm:$0xff]
        %v218 = vld [vmem:[%s169 + $0x170] sm:$0xff]
        %v219 = vld [vmem:[%s169 + $0x178] sm:$0xff]
        %v220 = vld [vmem:[%s169 + $0x180] sm:$0xff]
        %v221 = vld [vmem:[%s169 + $0x188] sm:$0xff]
        %v222 = vld [vmem:[%s169 + $0x190] sm:$0xff]
        %v223 = vld [vmem:[%s169 + $0x198] sm:$0xff]
        %v224 = vld [vmem:[%s169 + $0x1a0] sm:$0xff]
        %v225 = vld [vmem:[%s169 + $0x1a8] sm:$0xff]
        %v226 = vld [vmem:[%s169 + $0x1b0] sm:$0xff]
        %v227 = vld [vmem:[%s169 + $0x1b8] sm:$0xff]
        %v228 = vld [vmem:[%s169 + $0x1c0] sm:$0xff]
        %v229 = vld [vmem:[%s169 + $0x1c8] sm:$0xff]
        %v230 = vld [vmem:[%s169 + $0x1d0] sm:$0xff]
        %v231 = vld [vmem:[%s169 + $0x1d8] sm:$0xff]
        %v232 = vld [vmem:[%s169 + $0x1e0] sm:$0xff]
        %v233 = vld [vmem:[%s169 + $0x1e8] sm:$0xff]
        %v234 = vld [vmem:[%s169 + $0x1f0] sm:$0xff]
        %v235 = vld [vmem:[%s169 + $0x1f8] sm:$0xff]
        %v236 = vld [vmem:[%s1] sm:$0xff]
        %v237 = vld [vmem:[%s1 + $0x8] sm:$0xff]
        %v238 = vld [vmem:[%s1 + $0x10] sm:$0xff]
        %v239 = vld [vmem:[%s1 + $0x18] sm:$0x7]
        %v240 = vld [vmem:[%s2] sm:$0x1]
        %v242 = vlaneseq
        %v243 = vshrl.u32 %v242, 7
        %v244 = vsub.s32 0, %v243
        %v245 = vrot.slane %v240, %v244
        %vm247 = vcmask 220160
        %v249 = vsel %vm247, %v172, 0
        %v252 = vsel %vm247, %v173, 0
        %v255 = vsel %vm247, %v174, 0
        %v258 = vsel %vm247, %v175, 0
        %v261 = vsel %vm247, %v176, 0
        %v264 = vsel %vm247, %v177, 0
        %v267 = vsel %vm247, %v178, 0
        %v270 = vsel %vm247, %v179, 0
        %v273 = vsel %vm247, %v180, 0
        %v276 = vsel %vm247, %v181, 0
        %v279 = vsel %vm247, %v182, 0
        %v282 = vsel %vm247, %v183, 0
        %v285 = vsel %vm247, %v184, 0
        %v288 = vsel %vm247, %v185, 0
        %v291 = vsel %vm247, %v186, 0
        %v294 = vsel %vm247, %v187, 0
        %v297 = vsel %vm247, %v188, 0
        %v300 = vsel %vm247, %v189, 0
        %v303 = vsel %vm247, %v190, 0
        %v306 = vsel %vm247, %v191, 0
        %v309 = vsel %vm247, %v192, 0
        %v312 = vsel %vm247, %v193, 0
        %v315 = vsel %vm247, %v194, 0
        %v318 = vsel %vm247, %v195, 0
        %v321 = vsel %vm247, %v196, 0
        %v324 = vsel %vm247, %v197, 0
        %v327 = vsel %vm247, %v198, 0
        %v330 = vsel %vm247, %v199, 0
        %v333 = vsel %vm247, %v200, 0
        %v336 = vsel %vm247, %v201, 0
        %v339 = vsel %vm247, %v202, 0
        %v342 = vsel %vm247, %v203, 0
        %v345 = vsel %vm247, %v204, 0
        %v348 = vsel %vm247, %v205, 0
        %v351 = vsel %vm247, %v206, 0
        %v354 = vsel %vm247, %v207, 0
        %v357 = vsel %vm247, %v208, 0
        %v360 = vsel %vm247, %v209, 0
        %v363 = vsel %vm247, %v210, 0
        %v366 = vsel %vm247, %v211, 0
        %v369 = vsel %vm247, %v212, 0
        %v372 = vsel %vm247, %v213, 0
        %v375 = vsel %vm247, %v214, 0
        %v378 = vsel %vm247, %v215, 0
        %v381 = vsel %vm247, %v216, 0
        %v384 = vsel %vm247, %v217, 0
        %v387 = vsel %vm247, %v218, 0
        %v390 = vsel %vm247, %v219, 0
        %v393 = vsel %vm247, %v220, 0
        %v396 = vsel %vm247, %v221, 0
        %v399 = vsel %vm247, %v222, 0
        %v402 = vsel %vm247, %v223, 0
        %v405 = vsel %vm247, %v224, 0
        %v408 = vsel %vm247, %v225, 0
        %v411 = vsel %vm247, %v226, 0
        %v414 = vsel %vm247, %v227, 0
        %v417 = vsel %vm247, %v228, 0
        %v420 = vsel %vm247, %v229, 0
        %v423 = vsel %vm247, %v230, 0
        %v426 = vsel %vm247, %v231, 0
        %v429 = vsel %vm247, %v232, 0
        %v432 = vsel %vm247, %v233, 0
        %v435 = vsel %vm247, %v234, 0
        %v438 = vsel %vm247, %v235, 0
        %vm440 = vcmask 1042432
        %v442 = vsel %vm440, %v239, 0
        %444 = vmatprep.subr.mxu0 0.0
        %445 = vmatpush1.msra.mxu0 %v236
        %446 = vmatprep.subr.mxu0 0.0
        %447 = vmatpush1.msra.mxu0 %v237
        %448 = vmatprep.subr.mxu0 0.0
        %449 = vmatpush1.msra.mxu0 %v238
        %450 = vmatprep.subr.mxu0 0.0
        %451 = vmatpush1.msra.mxu0 %v442
        %452 = vmatprep.subr.mxu0 0.0
        %453 = vmatpush1.msra.mxu0 0.0
        %454 = vmatprep.subr.mxu0 0.0
        %455 = vmatpush1.msra.mxu0 0.0
        %456 = vmatprep.subr.mxu0 0.0
        %457 = vmatpush1.msra.mxu0 0.0
        %458 = vmatprep.subr.mxu0 0.0
        %459 = vmatpush1.msra.mxu0 0.0
        %460 = vmatprep.subr.mxu0 0.0
        %461 = vmatpush1.msra.mxu0 0.0
        %462 = vmatprep.subr.mxu0 0.0
        %463 = vmatpush1.msra.mxu0 0.0
        %464 = vmatprep.subr.mxu0 0.0
        %465 = vmatpush1.msra.mxu0 0.0
        %466 = vmatprep.subr.mxu0 0.0
        %467 = vmatpush1.msra.mxu0 0.0
        %468 = vmatprep.subr.mxu0 0.0
        %469 = vmatpush1.msra.mxu0 0.0
        %470 = vmatprep.subr.mxu0 0.0
        %471 = vmatpush1.msra.mxu0 0.0
        %472 = vmatprep.subr.mxu0 0.0
        %473 = vmatpush1.msra.mxu0 0.0
        %474 = vmatprep.subr.mxu0 0.0
        %475 = vmatpush1.msra.mxu0 0.0
        %476 = vmatprep.subr.mxu0 0.0
        %477 = vmatpush1.msra.mxu0 0.0
        %478 = vmatprep.subr.mxu0 0.0
        %479 = vmatpush1.msra.mxu0 0.0
        %480 = vmatprep.subr.mxu0 0.0
        %481 = vmatpush1.msra.mxu0 0.0
        %482 = vmatprep.subr.mxu0 0.0
        %483 = vmatpush1.msra.mxu0 0.0
        %484 = vmatprep.subr.mxu0 0.0
        %485 = vmatpush1.msra.mxu0 0.0
        %486 = vmatprep.subr.mxu0 0.0
        %487 = vmatpush1.msra.mxu0 0.0
        %488 = vmatprep.subr.mxu0 0.0
        %489 = vmatpush1.msra.mxu0 0.0
        %490 = vmatprep.subr.mxu0 0.0
        %491 = vmatpush1.msra.mxu0 0.0
        %492 = vmatprep.subr.mxu0 0.0
        %493 = vmatpush1.msra.mxu0 0.0
        %494 = vmatprep.subr.mxu0 0.0
        %495 = vmatpush1.msra.mxu0 0.0
        %496 = vmatprep.subr.mxu0 0.0
        %497 = vmatpush1.msra.mxu0 0.0
        %498 = vmatprep.subr.mxu0 0.0
        %499 = vmatpush1.msra.mxu0 0.0
        %500 = vmatprep.subr.mxu0 0.0
        %501 = vmatpush1.msra.mxu0 0.0
        %502 = vmatprep.subr.mxu0 0.0
        %503 = vmatpush1.msra.mxu0 0.0
        %504 = vmatprep.subr.mxu0 0.0
        %505 = vmatpush1.msra.mxu0 0.0
        %506 = vmatprep.subr.mxu0 0.0
        %507 = vmatpush1.msra.mxu0 0.0
        %508 = vmatprep.mubr.f32.mxu0 0.0
        %509 = vmatmul.mubr.f32.gmra.mrb[0].mxu0 %v249
        %v510 = vpop.f32.mrb[0].mxu0
        %v511 = vadd.f32 %v245, %v510
        %v512 = vpop.f32.mrb[0].mxu0
        %513 = vmatprep.mubr.f32.mxu0 0.0
        %514 = vmatmul.mubr.f32.gmra.mrb[0].mxu0 %v252
        %v515 = vpop.f32.mrb[0].mxu0
        %v516 = vadd.f32 %v245, %v515
        %v517 = vpop.f32.mrb[0].mxu0
        %518 = vmatprep.mubr.f32.mxu0 0.0
        %519 = vmatmul.mubr.f32.gmra.mrb[0].mxu0 %v255
        %v520 = vpop.f32.mrb[0].mxu0
        %v521 = vadd.f32 %v245, %v520
        %v522 = vpop.f32.mrb[0].mxu0
        %523 = vmatprep.mubr.f32.mxu0 0.0
        %524 = vmatmul.mubr.f32.gmra.mrb[0].mxu0 %v258
        %v525 = vpop.f32.mrb[0].mxu0
        %v526 = vadd.f32 %v245, %v525
        %v527 = vpop.f32.mrb[0].mxu0
        %528 = vmatprep.mubr.f32.mxu0 0.0
        %529 = vmatmul.mubr.f32.gmra.mrb[0].mxu0 %v261
        %v530 = vpop.f32.mrb[0].mxu0
        %v531 = vadd.f32 %v245, %v530
        %v532 = vpop.f32.mrb[0].mxu0
        %533 = vmatprep.mubr.f32.mxu0 0.0
        %534 = vmatmul.mubr.f32.gmra.mrb[0].mxu0 %v264
        %v535 = vpop.f32.mrb[0].mxu0
        %v536 = vadd.f32 %v245, %v535
        %v537 = vpop.f32.mrb[0].mxu0
        %538 = vmatprep.mubr.f32.mxu0 0.0
        %539 = vmatmul.mubr.f32.gmra.mrb[0].mxu0 %v267
        %v540 = vpop.f32.mrb[0].mxu0
        %v541 = vadd.f32 %v245, %v540
        %v542 = vpop.f32.mrb[0].mxu0
        %543 = vmatprep.mubr.f32.mxu0 0.0
        %544 = vmatmul.mubr.f32.gmra.mrb[0].mxu0 %v270
        %v545 = vpop.f32.mrb[0].mxu0
        %v546 = vadd.f32 %v245, %v545
        %v547 = vpop.f32.mrb[0].mxu0
        %548 = vmatprep.mubr.f32.mxu0 0.0
        %549 = vmatmul.mubr.f32.gmra.mrb[0].mxu0 %v273
        %v550 = vpop.f32.mrb[0].mxu0
        %v551 = vadd.f32 %v245, %v550
        %v552 = vpop.f32.mrb[0].mxu0
        %553 = vmatprep.mubr.f32.mxu0 0.0
        %554 = vmatmul.mubr.f32.gmra.mrb[0].mxu0 %v276
        %v555 = vpop.f32.mrb[0].mxu0
        %v556 = vadd.f32 %v245, %v555
        %v557 = vpop.f32.mrb[0].mxu0
        %558 = vmatprep.mubr.f32.mxu0 0.0
        %559 = vmatmul.mubr.f32.gmra.mrb[0].mxu0 %v279
        %v560 = vpop.f32.mrb[0].mxu0
        %v561 = vadd.f32 %v245, %v560
        %v562 = vpop.f32.mrb[0].mxu0
        %563 = vmatprep.mubr.f32.mxu0 0.0
        %564 = vmatmul.mubr.f32.gmra.mrb[0].mxu0 %v282
        %v565 = vpop.f32.mrb[0].mxu0
        %v566 = vadd.f32 %v245, %v565
        %v567 = vpop.f32.mrb[0].mxu0
        %568 = vmatprep.mubr.f32.mxu0 0.0
        %569 = vmatmul.mubr.f32.gmra.mrb[0].mxu0 %v285
        %v570 = vpop.f32.mrb[0].mxu0
        %v571 = vadd.f32 %v245, %v570
        %v572 = vpop.f32.mrb[0].mxu0
        %573 = vmatprep.mubr.f32.mxu0 0.0
        %574 = vmatmul.mubr.f32.gmra.mrb[0].mxu0 %v288
        %v575 = vpop.f32.mrb[0].mxu0
        %v576 = vadd.f32 %v245, %v575
        %v577 = vpop.f32.mrb[0].mxu0
        %578 = vmatprep.mubr.f32.mxu0 0.0
        %579 = vmatmul.mubr.f32.gmra.mrb[0].mxu0 %v291
        %v580 = vpop.f32.mrb[0].mxu0
        %v581 = vadd.f32 %v245, %v580
        %v582 = vpop.f32.mrb[0].mxu0
        %583 = vmatprep.mubr.f32.mxu0 0.0
        %584 = vmatmul.mubr.f32.gmra.mrb[0].mxu0 %v294
        %v585 = vpop.f32.mrb[0].mxu0
        %v586 = vadd.f32 %v245, %v585
        %v587 = vpop.f32.mrb[0].mxu0
        %588 = vmatprep.mubr.f32.mxu0 0.0
        %589 = vmatmul.mubr.f32.gmra.mrb[0].mxu0 %v297
        %v590 = vpop.f32.mrb[0].mxu0
        %v591 = vadd.f32 %v245, %v590
        %v592 = vpop.f32.mrb[0].mxu0
        %593 = vmatprep.mubr.f32.mxu0 0.0
        %594 = vmatmul.mubr.f32.gmra.mrb[0].mxu0 %v300
        %v595 = vpop.f32.mrb[0].mxu0
        %v596 = vadd.f32 %v245, %v595
        %v597 = vpop.f32.mrb[0].mxu0
        %598 = vmatprep.mubr.f32.mxu0 0.0
        %599 = vmatmul.mubr.f32.gmra.mrb[0].mxu0 %v303
        %v600 = vpop.f32.mrb[0].mxu0
        %v601 = vadd.f32 %v245, %v600
        %v602 = vpop.f32.mrb[0].mxu0
        %603 = vmatprep.mubr.f32.mxu0 0.0
        %604 = vmatmul.mubr.f32.gmra.mrb[0].mxu0 %v306
        %v605 = vpop.f32.mrb[0].mxu0
        %v606 = vadd.f32 %v245, %v605
        %v607 = vpop.f32.mrb[0].mxu0
        %608 = vmatprep.mubr.f32.mxu0 0.0
        %609 = vmatmul.mubr.f32.gmra.mrb[0].mxu0 %v309
        %v610 = vpop.f32.mrb[0].mxu0
        %v611 = vadd.f32 %v245, %v610
        %v612 = vpop.f32.mrb[0].mxu0
        %613 = vmatprep.mubr.f32.mxu0 0.0
        %614 = vmatmul.mubr.f32.gmra.mrb[0].mxu0 %v312
        %v615 = vpop.f32.mrb[0].mxu0
        %v616 = vadd.f32 %v245, %v615
        %v617 = vpop.f32.mrb[0].mxu0
        %618 = vmatprep.mubr.f32.mxu0 0.0
        %619 = vmatmul.mubr.f32.gmra.mrb[0].mxu0 %v315
        %v620 = vpop.f32.mrb[0].mxu0
        %v621 = vadd.f32 %v245, %v620
        %v622 = vpop.f32.mrb[0].mxu0
        %623 = vmatprep.mubr.f32.mxu0 0.0
        %624 = vmatmul.mubr.f32.gmra.mrb[0].mxu0 %v318
        %v625 = vpop.f32.mrb[0].mxu0
        %v626 = vadd.f32 %v245, %v625
        %v627 = vpop.f32.mrb[0].mxu0
        %628 = vmatprep.mubr.f32.mxu0 0.0
        %629 = vmatmul.mubr.f32.gmra.mrb[0].mxu0 %v321
        %v630 = vpop.f32.mrb[0].mxu0
        %v631 = vadd.f32 %v245, %v630
        %v632 = vpop.f32.mrb[0].mxu0
        %633 = vmatprep.mubr.f32.mxu0 0.0
        %634 = vmatmul.mubr.f32.gmra.mrb[0].mxu0 %v324
        %v635 = vpop.f32.mrb[0].mxu0
        %v636 = vadd.f32 %v245, %v635
        %v637 = vpop.f32.mrb[0].mxu0
        %638 = vmatprep.mubr.f32.mxu0 0.0
        %639 = vmatmul.mubr.f32.gmra.mrb[0].mxu0 %v327
        %v640 = vpop.f32.mrb[0].mxu0
        %v641 = vadd.f32 %v245, %v640
        %v642 = vpop.f32.mrb[0].mxu0
        %643 = vmatprep.mubr.f32.mxu0 0.0
        %644 = vmatmul.mubr.f32.gmra.mrb[0].mxu0 %v330
        %v645 = vpop.f32.mrb[0].mxu0
        %v646 = vadd.f32 %v245, %v645
        %v647 = vpop.f32.mrb[0].mxu0
        %648 = vmatprep.mubr.f32.mxu0 0.0
        %649 = vmatmul.mubr.f32.gmra.mrb[0].mxu0 %v333
        %v650 = vpop.f32.mrb[0].mxu0
        %v651 = vadd.f32 %v245, %v650
        %v652 = vpop.f32.mrb[0].mxu0
        %653 = vmatprep.mubr.f32.mxu0 0.0
        %654 = vmatmul.mubr.f32.gmra.mrb[0].mxu0 %v336
        %v655 = vpop.f32.mrb[0].mxu0
        %v656 = vadd.f32 %v245, %v655
        %v657 = vpop.f32.mrb[0].mxu0
        %658 = vmatprep.mubr.f32.mxu0 0.0
        %659 = vmatmul.mubr.f32.gmra.mrb[0].mxu0 %v339
        %v660 = vpop.f32.mrb[0].mxu0
        %v661 = vadd.f32 %v245, %v660
        %v662 = vpop.f32.mrb[0].mxu0
        %663 = vmatprep.mubr.f32.mxu0 0.0
        %664 = vmatmul.mubr.f32.gmra.mrb[0].mxu0 %v342
        %v665 = vpop.f32.mrb[0].mxu0
        %v666 = vadd.f32 %v245, %v665
        %v667 = vpop.f32.mrb[0].mxu0
        %668 = vmatprep.mubr.f32.mxu0 0.0
        %669 = vmatmul.mubr.f32.gmra.mrb[0].mxu0 %v345
        %v670 = vpop.f32.mrb[0].mxu0
        %v671 = vadd.f32 %v245, %v670
        %v672 = vpop.f32.mrb[0].mxu0
        %673 = vmatprep.mubr.f32.mxu0 0.0
        %674 = vmatmul.mubr.f32.gmra.mrb[0].mxu0 %v348
        %v675 = vpop.f32.mrb[0].mxu0
        %v676 = vadd.f32 %v245, %v675
        %v677 = vpop.f32.mrb[0].mxu0
        %678 = vmatprep.mubr.f32.mxu0 0.0
        %679 = vmatmul.mubr.f32.gmra.mrb[0].mxu0 %v351
        %v680 = vpop.f32.mrb[0].mxu0
        %v681 = vadd.f32 %v245, %v680
        %v682 = vpop.f32.mrb[0].mxu0
        %683 = vmatprep.mubr.f32.mxu0 0.0
        %684 = vmatmul.mubr.f32.gmra.mrb[0].mxu0 %v354
        %v685 = vpop.f32.mrb[0].mxu0
        %v686 = vadd.f32 %v245, %v685
        %v687 = vpop.f32.mrb[0].mxu0
        %688 = vmatprep.mubr.f32.mxu0 0.0
        %689 = vmatmul.mubr.f32.gmra.mrb[0].mxu0 %v357
        %v690 = vpop.f32.mrb[0].mxu0
        %v691 = vadd.f32 %v245, %v690
        %v692 = vpop.f32.mrb[0].mxu0
        %693 = vmatprep.mubr.f32.mxu0 0.0
        %694 = vmatmul.mubr.f32.gmra.mrb[0].mxu0 %v360
        %v695 = vpop.f32.mrb[0].mxu0
        %v696 = vadd.f32 %v245, %v695
        %v697 = vpop.f32.mrb[0].mxu0
        %698 = vmatprep.mubr.f32.mxu0 0.0
        %699 = vmatmul.mubr.f32.gmra.mrb[0].mxu0 %v363
        %v700 = vpop.f32.mrb[0].mxu0
        %v701 = vadd.f32 %v245, %v700
        %v702 = vpop.f32.mrb[0].mxu0
        %703 = vmatprep.mubr.f32.mxu0 0.0
        %704 = vmatmul.mubr.f32.gmra.mrb[0].mxu0 %v366
        %v705 = vpop.f32.mrb[0].mxu0
        %v706 = vadd.f32 %v245, %v705
        %v707 = vpop.f32.mrb[0].mxu0
        %708 = vmatprep.mubr.f32.mxu0 0.0
        %709 = vmatmul.mubr.f32.gmra.mrb[0].mxu0 %v369
        %v710 = vpop.f32.mrb[0].mxu0
        %v711 = vadd.f32 %v245, %v710
        %v712 = vpop.f32.mrb[0].mxu0
        %713 = vmatprep.mubr.f32.mxu0 0.0
        %714 = vmatmul.mubr.f32.gmra.mrb[0].mxu0 %v372
        %v715 = vpop.f32.mrb[0].mxu0
        %v716 = vadd.f32 %v245, %v715
        %v717 = vpop.f32.mrb[0].mxu0
        %718 = vmatprep.mubr.f32.mxu0 0.0
        %719 = vmatmul.mubr.f32.gmra.mrb[0].mxu0 %v375
        %v720 = vpop.f32.mrb[0].mxu0
        %v721 = vadd.f32 %v245, %v720
        %v722 = vpop.f32.mrb[0].mxu0
        %723 = vmatprep.mubr.f32.mxu0 0.0
        %724 = vmatmul.mubr.f32.gmra.mrb[0].mxu0 %v378
        %v725 = vpop.f32.mrb[0].mxu0
        %v726 = vadd.f32 %v245, %v725
        %v727 = vpop.f32.mrb[0].mxu0
        %728 = vmatprep.mubr.f32.mxu0 0.0
        %729 = vmatmul.mubr.f32.gmra.mrb[0].mxu0 %v381
        %v730 = vpop.f32.mrb[0].mxu0
        %v731 = vadd.f32 %v245, %v730
        %v732 = vpop.f32.mrb[0].mxu0
        %733 = vmatprep.mubr.f32.mxu0 0.0
        %734 = vmatmul.mubr.f32.gmra.mrb[0].mxu0 %v384
        %v735 = vpop.f32.mrb[0].mxu0
        %v736 = vadd.f32 %v245, %v735
        %v737 = vpop.f32.mrb[0].mxu0
        %738 = vmatprep.mubr.f32.mxu0 0.0
        %739 = vmatmul.mubr.f32.gmra.mrb[0].mxu0 %v387
        %v740 = vpop.f32.mrb[0].mxu0
        %v741 = vadd.f32 %v245, %v740
        %v742 = vpop.f32.mrb[0].mxu0
        %743 = vmatprep.mubr.f32.mxu0 0.0
        %744 = vmatmul.mubr.f32.gmra.mrb[0].mxu0 %v390
        %v745 = vpop.f32.mrb[0].mxu0
        %v746 = vadd.f32 %v245, %v745
        %v747 = vpop.f32.mrb[0].mxu0
        %748 = vmatprep.mubr.f32.mxu0 0.0
        %749 = vmatmul.mubr.f32.gmra.mrb[0].mxu0 %v393
        %v750 = vpop.f32.mrb[0].mxu0
        %v751 = vadd.f32 %v245, %v750
        %v752 = vpop.f32.mrb[0].mxu0
        %753 = vmatprep.mubr.f32.mxu0 0.0
        %754 = vmatmul.mubr.f32.gmra.mrb[0].mxu0 %v396
        %v755 = vpop.f32.mrb[0].mxu0
        %v756 = vadd.f32 %v245, %v755
        %v757 = vpop.f32.mrb[0].mxu0
        %758 = vmatprep.mubr.f32.mxu0 0.0
        %759 = vmatmul.mubr.f32.gmra.mrb[0].mxu0 %v399
        %v760 = vpop.f32.mrb[0].mxu0
        %v761 = vadd.f32 %v245, %v760
        %v762 = vpop.f32.mrb[0].mxu0
        %763 = vmatprep.mubr.f32.mxu0 0.0
        %764 = vmatmul.mubr.f32.gmra.mrb[0].mxu0 %v402
        %v765 = vpop.f32.mrb[0].mxu0
        %v766 = vadd.f32 %v245, %v765
        %v767 = vpop.f32.mrb[0].mxu0
        %768 = vmatprep.mubr.f32.mxu0 0.0
        %769 = vmatmul.mubr.f32.gmra.mrb[0].mxu0 %v405
        %v770 = vpop.f32.mrb[0].mxu0
        %v771 = vadd.f32 %v245, %v770
        %v772 = vpop.f32.mrb[0].mxu0
        %773 = vmatprep.mubr.f32.mxu0 0.0
        %774 = vmatmul.mubr.f32.gmra.mrb[0].mxu0 %v408
        %v775 = vpop.f32.mrb[0].mxu0
        %v776 = vadd.f32 %v245, %v775
        %v777 = vpop.f32.mrb[0].mxu0
        %778 = vmatprep.mubr.f32.mxu0 0.0
        %779 = vmatmul.mubr.f32.gmra.mrb[0].mxu0 %v411
        %v780 = vpop.f32.mrb[0].mxu0
        %v781 = vadd.f32 %v245, %v780
        %v782 = vpop.f32.mrb[0].mxu0
        %783 = vmatprep.mubr.f32.mxu0 0.0
        %784 = vmatmul.mubr.f32.gmra.mrb[0].mxu0 %v414
        %v785 = vpop.f32.mrb[0].mxu0
        %v786 = vadd.f32 %v245, %v785
        %v787 = vpop.f32.mrb[0].mxu0
        %788 = vmatprep.mubr.f32.mxu0 0.0
        %789 = vmatmul.mubr.f32.gmra.mrb[0].mxu0 %v417
        %v790 = vpop.f32.mrb[0].mxu0
        %v791 = vadd.f32 %v245, %v790
        %v792 = vpop.f32.mrb[0].mxu0
        %793 = vmatprep.mubr.f32.mxu0 0.0
        %794 = vmatmul.mubr.f32.gmra.mrb[0].mxu0 %v420
        %v795 = vpop.f32.mrb[0].mxu0
        %v796 = vadd.f32 %v245, %v795
        %v797 = vpop.f32.mrb[0].mxu0
        %798 = vmatprep.mubr.f32.mxu0 0.0
        %799 = vmatmul.mubr.f32.gmra.mrb[0].mxu0 %v423
        %v800 = vpop.f32.mrb[0].mxu0
        %v801 = vadd.f32 %v245, %v800
        %v802 = vpop.f32.mrb[0].mxu0
        %803 = vmatprep.mubr.f32.mxu0 0.0
        %804 = vmatmul.mubr.f32.gmra.mrb[0].mxu0 %v426
        %v805 = vpop.f32.mrb[0].mxu0
        %v806 = vadd.f32 %v245, %v805
        %v807 = vpop.f32.mrb[0].mxu0
        %808 = vmatprep.mubr.f32.mxu0 0.0
        %809 = vmatmul.mubr.f32.gmra.mrb[0].mxu0 %v429
        %v810 = vpop.f32.mrb[0].mxu0
        %v811 = vadd.f32 %v245, %v810
        %v812 = vpop.f32.mrb[0].mxu0
        %813 = vmatprep.mubr.f32.mxu0 0.0
        %814 = vmatmul.mubr.f32.gmra.mrb[0].mxu0 %v432
        %v815 = vpop.f32.mrb[0].mxu0
        %v816 = vadd.f32 %v245, %v815
        %v817 = vpop.f32.mrb[0].mxu0
        %818 = vmatprep.mubr.f32.mxu0 0.0
        %819 = vmatmul.mubr.f32.gmra.mrb[0].mxu0 %v435
        %v820 = vpop.f32.mrb[0].mxu0
        %v821 = vadd.f32 %v245, %v820
        %v822 = vpop.f32.mrb[0].mxu0
        %823 = vmatprep.mubr.f32.mxu0 0.0
        %824 = vmatmul.mubr.f32.gmra.mrb[0].mxu0 %v438
        %v825 = vpop.f32.mrb[0].mxu0
        %v826 = vadd.f32 %v245, %v825
        %v827 = vpop.f32.mrb[0].mxu0
        %828 = vdwg.mxu0
        %v829 = vmax.f32 %v511, 0.0
        %v830 = vmax.f32 %v516, 0.0
        %v831 = vmax.f32 %v521, 0.0
        %v832 = vmax.f32 %v526, 0.0
        %v833 = vmax.f32 %v531, 0.0
        %v834 = vmax.f32 %v536, 0.0
        %v835 = vmax.f32 %v541, 0.0
        %v836 = vmax.f32 %v546, 0.0
        %v837 = vmax.f32 %v551, 0.0
        %v838 = vmax.f32 %v556, 0.0
        %v839 = vmax.f32 %v561, 0.0
        %v840 = vmax.f32 %v566, 0.0
        %v841 = vmax.f32 %v571, 0.0
        %v842 = vmax.f32 %v576, 0.0
        %v843 = vmax.f32 %v581, 0.0
        %v844 = vmax.f32 %v586, 0.0
        %v845 = vmax.f32 %v591, 0.0
        %v846 = vmax.f32 %v596, 0.0
        %v847 = vmax.f32 %v601, 0.0
        %v848 = vmax.f32 %v606, 0.0
        %v849 = vmax.f32 %v611, 0.0
        %v850 = vmax.f32 %v616, 0.0
        %v851 = vmax.f32 %v621, 0.0
        %v852 = vmax.f32 %v626, 0.0
        %v853 = vmax.f32 %v631, 0.0
        %v854 = vmax.f32 %v636, 0.0
        %v855 = vmax.f32 %v641, 0.0
        %v856 = vmax.f32 %v646, 0.0
        %v857 = vmax.f32 %v651, 0.0
        %v858 = vmax.f32 %v656, 0.0
        %v859 = vmax.f32 %v661, 0.0
        %v860 = vmax.f32 %v666, 0.0
        %v861 = vmax.f32 %v671, 0.0
        %v862 = vmax.f32 %v676, 0.0
        %v863 = vmax.f32 %v681, 0.0
        %v864 = vmax.f32 %v686, 0.0
        %v865 = vmax.f32 %v691, 0.0
        %v866 = vmax.f32 %v696, 0.0
        %v867 = vmax.f32 %v701, 0.0
        %v868 = vmax.f32 %v706, 0.0
        %v869 = vmax.f32 %v711, 0.0
        %v870 = vmax.f32 %v716, 0.0
        %v871 = vmax.f32 %v721, 0.0
        %v872 = vmax.f32 %v726, 0.0
        %v873 = vmax.f32 %v731, 0.0
        %v874 = vmax.f32 %v736, 0.0
        %v875 = vmax.f32 %v741, 0.0
        %v876 = vmax.f32 %v746, 0.0
        %v877 = vmax.f32 %v751, 0.0
        %v878 = vmax.f32 %v756, 0.0
        %v879 = vmax.f32 %v761, 0.0
        %v880 = vmax.f32 %v766, 0.0
        %v881 = vmax.f32 %v771, 0.0
        %v882 = vmax.f32 %v776, 0.0
        %v883 = vmax.f32 %v781, 0.0
        %v884 = vmax.f32 %v786, 0.0
        %v885 = vmax.f32 %v791, 0.0
        %v886 = vmax.f32 %v796, 0.0
        %v887 = vmax.f32 %v801, 0.0
        %v888 = vmax.f32 %v806, 0.0
        %v889 = vmax.f32 %v811, 0.0
        %v890 = vmax.f32 %v816, 0.0
        %v891 = vmax.f32 %v821, 0.0
        %v892 = vmax.f32 %v826, 0.0
        %893 = vst [vmem:[%s164] sm:$0xff] %v829
        %894 = vst [vmem:[%s164 + $0x8] sm:$0xff] %v830
        %895 = vst [vmem:[%s164 + $0x10] sm:$0xff] %v831
        %896 = vst [vmem:[%s164 + $0x18] sm:$0xff] %v832
        %897 = vst [vmem:[%s164 + $0x20] sm:$0xff] %v833
        %898 = vst [vmem:[%s164 + $0x28] sm:$0xff] %v834
        %899 = vst [vmem:[%s164 + $0x30] sm:$0xff] %v835
        %900 = vst [vmem:[%s164 + $0x38] sm:$0xff] %v836
        %901 = vst [vmem:[%s164 + $0x40] sm:$0xff] %v837
        %902 = vst [vmem:[%s164 + $0x48] sm:$0xff] %v838
        %903 = vst [vmem:[%s164 + $0x50] sm:$0xff] %v839
        %904 = vst [vmem:[%s164 + $0x58] sm:$0xff] %v840
        %905 = vst [vmem:[%s164 + $0x60] sm:$0xff] %v841
        %906 = vst [vmem:[%s164 + $0x68] sm:$0xff] %v842
        %907 = vst [vmem:[%s164 + $0x70] sm:$0xff] %v843
        %908 = vst [vmem:[%s164 + $0x78] sm:$0xff] %v844
        %909 = vst [vmem:[%s164 + $0x80] sm:$0xff] %v845
        %910 = vst [vmem:[%s164 + $0x88] sm:$0xff] %v846
        %911 = vst [vmem:[%s164 + $0x90] sm:$0xff] %v847
        %912 = vst [vmem:[%s164 + $0x98] sm:$0xff] %v848
        %913 = vst [vmem:[%s164 + $0xa0] sm:$0xff] %v849
        %914 = vst [vmem:[%s164 + $0xa8] sm:$0xff] %v850
        %915 = vst [vmem:[%s164 + $0xb0] sm:$0xff] %v851
        %916 = vst [vmem:[%s164 + $0xb8] sm:$0xff] %v852
        %917 = vst [vmem:[%s164 + $0xc0] sm:$0xff] %v853
        %918 = vst [vmem:[%s164 + $0xc8] sm:$0xff] %v854
        %919 = vst [vmem:[%s164 + $0xd0] sm:$0xff] %v855
        %920 = vst [vmem:[%s164 + $0xd8] sm:$0xff] %v856
        %921 = vst [vmem:[%s164 + $0xe0] sm:$0xff] %v857
        %922 = vst [vmem:[%s164 + $0xe8] sm:$0xff] %v858
        %923 = vst [vmem:[%s164 + $0xf0] sm:$0xff] %v859
        %924 = vst [vmem:[%s164 + $0xf8] sm:$0xff] %v860
        %925 = vst [vmem:[%s164 + $0x100] sm:$0xff] %v861
        %926 = vst [vmem:[%s164 + $0x108] sm:$0xff] %v862
        %927 = vst [vmem:[%s164 + $0x110] sm:$0xff] %v863
        %928 = vst [vmem:[%s164 + $0x118] sm:$0xff] %v864
        %929 = vst [vmem:[%s164 + $0x120] sm:$0xff] %v865
        %930 = vst [vmem:[%s164 + $0x128] sm:$0xff] %v866
        %931 = vst [vmem:[%s164 + $0x130] sm:$0xff] %v867
        %932 = vst [vmem:[%s164 + $0x138] sm:$0xff] %v868
        %933 = vst [vmem:[%s164 + $0x140] sm:$0xff] %v869
        %934 = vst [vmem:[%s164 + $0x148] sm:$0xff] %v870
        %935 = vst [vmem:[%s164 + $0x150] sm:$0xff] %v871
        %936 = vst [vmem:[%s164 + $0x158] sm:$0xff] %v872
        %937 = vst [vmem:[%s164 + $0x160] sm:$0xff] %v873
        %938 = vst [vmem:[%s164 + $0x168] sm:$0xff] %v874
        %939 = vst [vmem:[%s164 + $0x170] sm:$0xff] %v875
        %940 = vst [vmem:[%s164 + $0x178] sm:$0xff] %v876
        %941 = vst [vmem:[%s164 + $0x180] sm:$0xff] %v877
        %942 = vst [vmem:[%s164 + $0x188] sm:$0xff] %v878
        %943 = vst [vmem:[%s164 + $0x190] sm:$0xff] %v879
        %944 = vst [vmem:[%s164 + $0x198] sm:$0xff] %v880
        %945 = vst [vmem:[%s164 + $0x1a0] sm:$0xff] %v881
        %946 = vst [vmem:[%s164 + $0x1a8] sm:$0xff] %v882
        %947 = vst [vmem:[%s164 + $0x1b0] sm:$0xff] %v883
        %948 = vst [vmem:[%s164 + $0x1b8] sm:$0xff] %v884
        %949 = vst [vmem:[%s164 + $0x1c0] sm:$0xff] %v885
        %950 = vst [vmem:[%s164 + $0x1c8] sm:$0xff] %v886
        %951 = vst [vmem:[%s164 + $0x1d0] sm:$0xff] %v887
        %952 = vst [vmem:[%s164 + $0x1d8] sm:$0xff] %v888
        %953 = vst [vmem:[%s164 + $0x1e0] sm:$0xff] %v889
        %954 = vst [vmem:[%s164 + $0x1e8] sm:$0xff] %v890
        %955 = vst [vmem:[%s164 + $0x1f0] sm:$0xff] %v891
        %956 = vst [vmem:[%s164 + $0x1f8] sm:$0xff] %v892
        %s957 = sand.u32 %s93, 1
        %s958 = scalar_lea.sflag [#allocation3], %s957
        %s959 = sand.u32 %s93, 1
        %s960 = smul.addr %s959, 512
        %s961 = scalar_lea.vmem [#allocation2], %s960
        // Predicated region
        $region33: #{tpu_custom_call.1} parent=31 // pred_check
          %p962 = pneg %p103
        $region34: #{tpu_custom_call.1} parent=31 // pred_check_branch
          %964 = sbr.rel (%p962) target = $region36
        $region35: #{tpu_custom_call.1} parent=31 // pred_region
          %s965 = smul.u32 64, %s17
          %s967 = ssub.s32 8192, 8192
          %968 = vsyncadd %s958, %s967
          %s969 = smul.addr %s965, 128
          %s970 = scalar_lea.hbm %s3, %s969
          %s971 = sshll.u32 %s961, 4
          %s972 = int_to_ptr.vmem [resolvable:$true] %s971
          %977 = dma.vmem_to_hbm [thread:$0]  %s972, 8192, %s970, %s958, 128, 128, 8
        $region36: #{tpu_custom_call.1} parent=31 // pred_fallthru
          _
      $region32: #{tpu_custom_call.1} parent=5 // pred_fallthru
        _
      %p978 = scmp.le.s32.totalorder 2, %s12
      // Predicated region
      $region37: #{tpu_custom_call.1} parent=5 // pred_check
        %p979 = pneg %p978
      $region38: #{tpu_custom_call.1} parent=5 // pred_check_branch
        %981 = sbr.rel (%p979) target = $region40
      $region39: #{tpu_custom_call.1} parent=5 // pred_region
        %s982 = ssub.s32 %s12, 2
        // Predicated region
        $region41: #{tpu_custom_call.1} parent=39 // pred_check
          %p983 = pneg %p109
        $region42: #{tpu_custom_call.1} parent=39 // pred_check_branch
          %985 = sbr.rel (%p983) target = $region44
        $region43: #{tpu_custom_call.1} parent=39 // pred_region
          %s986 = sand.u32 %s94, 1
          %s987 = scalar_lea.sflag [#allocation3], %s986
          %s988 = sand.u32 %s94, 1
          %s989 = smul.addr %s988, 512
          %s990 = scalar_lea.vmem [#allocation2], %s989
          %991 = dma.done %s987, 8192
        $region44: #{tpu_custom_call.1} parent=39 // pred_fallthru
          _
      $region40: #{tpu_custom_call.1} parent=5 // pred_fallthru
        _
    $region6: #{tpu_custom_call.1} parent=1 // loop_footer
      %s16 = sadd.s32 1, %s12
    $region7: #{tpu_custom_call.1} parent=1 // loop_footer_branch
      %11 = sbr.rel target = $region3
    $region8: #{tpu_custom_call.1} parent=1 // loop_exit
      _
    %992 = vsyncpa [#allocation3], 1
    %s993 = scalar_lea.sflag [#allocation3], 1
    %994 = vsyncpa %s993, 1

</llo_original>
